<compile_context>
chip_gen: v6e
topology: v6e:2x2x1
jax: 0.10.0
libtpu: 0.0.40
codegen_flags: <defaults>
</compile_context>

<pallas_src>
import functools

import jax
import jax.numpy as jnp
from jax.experimental import pallas as pl
from jax.experimental.pallas import tpu as pltpu

IN_F = 42        # flattened input features
HID = 1000       # hidden width in the PyTorch module
HID_PAD = 1024   # hidden padded to full 8x128 lane tiles
MID_PAD = 128    # middle-layer output (42) padded to one full lane tile
OUT_PAD = 128    # fused head width (sum(class_list)=26) padded to one lane tile


def _round_up(v, m):
    return ((v + m - 1) // m) * m


def _use_bf16_epilogue():
    """bf16 bias+ReLU epilogue only on chips with bf16 VPU ALUs (v6e/v7x)."""
    try:
        kind = jax.devices()[0].device_kind.lower()
    except Exception:
        return False
    if "tpu" not in kind:
        return False
    return ("v5" not in kind) and ("v4" not in kind) and ("v3" not in kind) \
        and ("v2" not in kind)


# ----------------------------------------------------------------------------
# Pallas kernel: whole hot path (3 matmuls + bias + ReLU) in VMEM.
# ----------------------------------------------------------------------------
def _mlp_kernel(x_ref, w1_ref, b1_ref, w2_ref, b2_ref, wh_ref, bh_ref, out_ref,
                *, bf16_epilogue):
    x = x_ref[...]                                                 # (TB, 42) f32

    # Linear(42,1000) + folded BatchNorm1d(1000) (+ identity Dropout) + ReLU
    h = jnp.dot(x.astype(jnp.bfloat16), w1_ref[...],
                preferred_element_type=jnp.float32)                # (TB, 1024) f32 acc
    if bf16_epilogue:
        h = jnp.maximum(h.astype(jnp.bfloat16)
                        + b1_ref[...].astype(jnp.bfloat16), 0.0)   # bf16 epilogue
    else:
        h = jnp.maximum(h + b1_ref[...], 0.0).astype(jnp.bfloat16)  # f32 epilogue (v5e)

    # Linear(1000,42) + folded BatchNorm1d(42) + ReLU  (output padded to 128 lanes)
    y = jnp.dot(h, w2_ref[...], preferred_element_type=jnp.float32)  # (TB, 128)
    if bf16_epilogue:
        y = jnp.maximum(y.astype(jnp.bfloat16)
                        + b2_ref[...].astype(jnp.bfloat16), 0.0)
    else:
        y = jnp.maximum(y + b2_ref[...], 0.0).astype(jnp.bfloat16)

    # 9 classification heads fused into one (128, 128) matmul (zero-padded)
    out = jnp.dot(y, wh_ref[...], preferred_element_type=jnp.float32)  # (TB, 128)
    out_ref[...] = out + bh_ref[...]


def _pick_batch_tile(B, cap=1024):
    """Batch tile: minimal padding, >=2 tiles for mid/large B (v7x dual-TC)."""
    if B <= 16:
        return max(8, _round_up(B, 8))
    if B <= 2 * cap:
        # at least two tiles so the "parallel" axis can shard across both
        # TensorCores on v7x; padding stays <= 7 rows per tile.
        return _round_up(pl.cdiv(B, 2), 8)
    nb = pl.cdiv(B, cap)
    return _round_up(pl.cdiv(B, nb), 8)


def mlp_with_uncertainty_forward(x, params, class_list):
    """x: (B, ...) flattened to (B, 42). Returns list with a 9-tuple of logits."""
    B = x.shape[0]
    x = x.reshape(B, -1).astype(jnp.float32)                      # x.view(B, -1)
    assert x.shape[1] == IN_F

    w1, b1, w2, b2, wh, bh = params
    c_total = sum(class_list)

    TB = _pick_batch_tile(B)
    nb = pl.cdiv(B, TB)
    B_pad = nb * TB
    if B_pad != B:
        x = jnp.pad(x, ((0, B_pad - B), (0, 0)))

    bf16_epilogue = _use_bf16_epilogue()
    kernel = functools.partial(_mlp_kernel, bf16_epilogue=bf16_epilogue)

    flops = 2 * B_pad * (IN_F * HID_PAD + HID_PAD * MID_PAD + MID_PAD * OUT_PAD)
    bytes_accessed = (w1.size * 2 + w2.size * 2 + wh.size * 2      # bf16 weights
                      + (b1.size + b2.size + bh.size) * 4          # f32 biases
                      + B_pad * (IN_F + OUT_PAD) * 4)              # x in, out

    out = pl.pallas_call(
        kernel,
        out_shape=jax.ShapeDtypeStruct((B_pad, OUT_PAD), jnp.float32),
        grid=(nb,),
        in_specs=[
            pl.BlockSpec((TB, IN_F), lambda i: (i, 0)),        # x: tiled by batch
            pl.BlockSpec(w1.shape, lambda i: (0, 0)),          # weights resident
            pl.BlockSpec(b1.shape, lambda i: (0, 0)),
            pl.BlockSpec(w2.shape, lambda i: (0, 0)),
            pl.BlockSpec(b2.shape, lambda i: (0, 0)),
            pl.BlockSpec(wh.shape, lambda i: (0, 0)),
            pl.BlockSpec(bh.shape, lambda i: (0, 0)),
        ],
        out_specs=pl.BlockSpec((TB, OUT_PAD), lambda i: (i, 0)),
        compiler_params=pltpu.CompilerParams(
            dimension_semantics=("parallel",),
            vmem_limit_bytes=32 * 1024 * 1024),
        cost_estimate=pl.CostEstimate(
            flops=flops, transcendentals=0, bytes_accessed=bytes_accessed),
    )(x, w1, b1, w2, b2, wh, bh)

    out = out[:B, :c_total]                                    # drop batch/lane padding

    # Split the fused head output back into the 9 logit tensors.
    logits, off = [], 0
    for c in class_list:
        logits.append(out[:, off:off + c])
        off += c
    return [tuple(logits)]


# ----------------------------------------------------------------------------
# Deterministic parameter construction + BN folding + padding (plain JAX).
# ----------------------------------------------------------------------------
def make_params(key, class_list):
    def linear(key, fan_in, fan_out):
        kw, kb = jax.random.split(key)
        bound = 1.0 / jnp.sqrt(fan_in)
        # stored as (in, out) so kernel does x @ W
        w = jax.random.uniform(kw, (fan_in, fan_out), jnp.float32, -bound, bound)
        b = jax.random.uniform(kb, (fan_out,), jnp.float32, -bound, bound)
        return w, b

    def bn_affine(key, n, eps=1e-5):
        k1, k2, k3, k4 = jax.random.split(key, 4)
        gamma = 1.0 + 0.1 * jax.random.normal(k1, (n,), jnp.float32)
        beta = 0.1 * jax.random.normal(k2, (n,), jnp.float32)
        running_mean = 0.1 * jax.random.normal(k3, (n,), jnp.float32)
        running_var = jnp.abs(1.0 + 0.1 * jax.random.normal(k4, (n,), jnp.float32))
        scale = gamma / jnp.sqrt(running_var + eps)
        shift = beta - running_mean * scale
        return scale, shift

    keys = jax.random.split(key, 4 + len(class_list))
    w1, b1 = linear(keys[0], IN_F, HID)
    s1, t1 = bn_affine(keys[1], HID)
    w2, b2 = linear(keys[2], HID, IN_F)
    s2, t2 = bn_affine(keys[3], IN_F)

    # Fold BatchNorm affine into the linear layers (eval-mode identity).
    w1f = w1 * s1[None, :]
    b1f = b1 * s1 + t1
    w2f = w2 * s2[None, :]
    b2f = b2 * s2 + t2

    # Pad hidden dim 1000 -> 1024 and middle output 42 -> 128 with exact zeros.
    w1f = jnp.pad(w1f, ((0, 0), (0, HID_PAD - HID)))
    b1f = jnp.pad(b1f, ((0, HID_PAD - HID),))
    w2f = jnp.pad(w2f, ((0, HID_PAD - HID), (0, MID_PAD - IN_F)))
    b2f = jnp.pad(b2f, ((0, MID_PAD - IN_F),))

    # 9 heads fused into one matmul; rows padded 42->128 to match y's padding,
    # columns padded 26->128 for a full lane-dense output.
    head_ws, head_bs = [], []
    for i, c in enumerate(class_list):
        w, b = linear(keys[4 + i], IN_F, c)
        head_ws.append(w)
        head_bs.append(b)
    wh = jnp.concatenate(head_ws, axis=1)                      # (42, 26)
    bh = jnp.concatenate(head_bs, axis=0)                      # (26,)
    c_total = wh.shape[1]
    wh = jnp.pad(wh, ((0, MID_PAD - IN_F), (0, OUT_PAD - c_total)))   # (128, 128)
    bh = jnp.pad(bh, ((0, OUT_PAD - c_total),))

    params = (w1f.astype(jnp.bfloat16), b1f.reshape(1, HID_PAD),
              w2f.astype(jnp.bfloat16), b2f.reshape(1, MID_PAD),
              wh.astype(jnp.bfloat16), bh.reshape(1, OUT_PAD))
    raw = (w1, b1, s1, t1, w2, b2, s2, t2, head_ws, head_bs)
    return params, raw


def reference_forward(x, raw, class_list):
    """Pure-JAX f32 reference matching the PyTorch eval-mode forward."""
    (w1, b1, s1, t1, w2, b2, s2, t2, head_ws, head_bs) = raw
    B = x.shape[0]
    x = x.reshape(B, -1)
    h = x @ w1 + b1
    h = h * s1 + t1
    h = jnp.maximum(h, 0.0)
    y = h @ w2 + b2
    y = y * s2 + t2
    y = jnp.maximum(y, 0.0)
    return [tuple(y @ w + b for w, b in zip(head_ws, head_bs))]


if __name__ == "__main__":
    # class_list = [num_label, num_pn, num_str, num_pig, num_rs,
    #               num_dag, num_bwv, num_vs, num_uncertainty]
    class_list = [5, 3, 3, 3, 2, 3, 2, 3, 2]

    key = jax.random.PRNGKey(0)
    kx, kp = jax.random.split(key)

    B = 8
    x = jax.random.normal(kx, (B, IN_F), jnp.float32)            # flattens to (B, 42)
    params, raw = make_params(kp, class_list)

    fwd = jax.jit(functools.partial(mlp_with_uncertainty_forward,
                                    class_list=class_list))
    out = jax.block_until_ready(fwd(x, params))

    ref = reference_forward(x, raw, class_list)
    for got, want, c in zip(out[0], ref[0], class_list):
        assert got.shape == (B, c)
        assert jnp.isfinite(got).all()
        assert jnp.allclose(got, want, rtol=5e-2, atol=5e-2), (
            "kernel output diverged from f32 reference")

    print("KERNEL_OK")
</pallas_src>

<mosaic_0001>
module attributes {stable_mosaic.version = 11 : i64} {
  func.func @_mlp_kernel(%arg0: i32, %arg1: memref<8x42xf32, #tpu.memory_space<vmem>>, %arg2: memref<42x1024xbf16, #tpu.memory_space<vmem>>, %arg3: memref<1x1024xf32, #tpu.memory_space<vmem>>, %arg4: memref<1024x128xbf16, #tpu.memory_space<vmem>>, %arg5: memref<1x128xf32, #tpu.memory_space<vmem>>, %arg6: memref<128x128xbf16, #tpu.memory_space<vmem>>, %arg7: memref<1x128xf32, #tpu.memory_space<vmem>>, %arg8: memref<8x128xf32, #tpu.memory_space<vmem>>) attributes {dimension_semantics = [#tpu.dimension_semantics<parallel>], iteration_bounds = array<i64: 1>, scalar_prefetch = 0 : i64, scratch_operands = 0 : i64, tpu.core_type = #tpu.core_type<tc>, window_params = [{transform_indices = @transform_0, window_bounds = array<i64: 8, 42>}, {pipeline_mode = #tpu.pipeline_mode<synchronous>, transform_indices = @transform_1, window_bounds = array<i64: 42, 1024>}, {pipeline_mode = #tpu.pipeline_mode<synchronous>, transform_indices = @transform_2, window_bounds = array<i64: 1, 1024>}, {pipeline_mode = #tpu.pipeline_mode<synchronous>, transform_indices = @transform_3, window_bounds = array<i64: 1024, 128>}, {pipeline_mode = #tpu.pipeline_mode<synchronous>, transform_indices = @transform_4, window_bounds = array<i64: 1, 128>}, {pipeline_mode = #tpu.pipeline_mode<synchronous>, transform_indices = @transform_5, window_bounds = array<i64: 128, 128>}, {pipeline_mode = #tpu.pipeline_mode<synchronous>, transform_indices = @transform_6, window_bounds = array<i64: 1, 128>}, {transform_indices = @transform_7, window_bounds = array<i64: 8, 128>}]} {
    %c0 = arith.constant 0 : index
    %c0_0 = arith.constant 0 : index
    %0 = vector.load %arg1[%c0, %c0_0] : memref<8x42xf32, #tpu.memory_space<vmem>>, vector<8x42xf32>
    %1 = arith.truncf %0 : vector<8x42xf32> to vector<8x42xbf16>
    %c0_1 = arith.constant 0 : index
    %c0_2 = arith.constant 0 : index
    %2 = vector.load %arg2[%c0_1, %c0_2] : memref<42x1024xbf16, #tpu.memory_space<vmem>>, vector<42x1024xbf16>
    %cst = arith.constant dense<0.000000e+00> : vector<8x1024xf32>
    %3 = tpu.matmul %1, %2, %cst {dimension_numbers = #tpu.dot_dimension_numbers<[1], [0], [0], [1], [0, 0, 1, 1], [], []>} : vector<8x42xbf16>, vector<42x1024xbf16>, vector<8x1024xf32> -> vector<8x1024xf32>
    %c0_3 = arith.constant 0 : index
    %c0_4 = arith.constant 0 : index
    %4 = vector.load %arg3[%c0_3, %c0_4] : memref<1x1024xf32, #tpu.memory_space<vmem>>, vector<1x1024xf32>
    %5 = vector.broadcast %4 : vector<1x1024xf32> to vector<8x1024xf32>
    %6 = arith.addf %3, %5 : vector<8x1024xf32>
    %cst_5 = arith.constant 0.000000e+00 : f32
    %7 = vector.broadcast %cst_5 : f32 to vector<8x1024xf32>
    %8 = arith.maximumf %6, %7 : vector<8x1024xf32>
    %9 = arith.truncf %8 : vector<8x1024xf32> to vector<8x1024xbf16>
    %c0_6 = arith.constant 0 : index
    %c0_7 = arith.constant 0 : index
    %10 = vector.load %arg4[%c0_6, %c0_7] : memref<1024x128xbf16, #tpu.memory_space<vmem>>, vector<1024x128xbf16>
    %cst_8 = arith.constant dense<0.000000e+00> : vector<8x128xf32>
    %11 = tpu.matmul %9, %10, %cst_8 {dimension_numbers = #tpu.dot_dimension_numbers<[1], [0], [0], [1], [0, 0, 1, 1], [], []>} : vector<8x1024xbf16>, vector<1024x128xbf16>, vector<8x128xf32> -> vector<8x128xf32>
    %c0_9 = arith.constant 0 : index
    %c0_10 = arith.constant 0 : index
    %12 = vector.load %arg5[%c0_9, %c0_10] : memref<1x128xf32, #tpu.memory_space<vmem>>, vector<1x128xf32>
    %13 = vector.broadcast %12 : vector<1x128xf32> to vector<8x128xf32>
    %14 = arith.addf %11, %13 : vector<8x128xf32>
    %cst_11 = arith.constant 0.000000e+00 : f32
    %15 = vector.broadcast %cst_11 : f32 to vector<8x128xf32>
    %16 = arith.maximumf %14, %15 : vector<8x128xf32>
    %17 = arith.truncf %16 : vector<8x128xf32> to vector<8x128xbf16>
    %c0_12 = arith.constant 0 : index
    %c0_13 = arith.constant 0 : index
    %18 = vector.load %arg6[%c0_12, %c0_13] : memref<128x128xbf16, #tpu.memory_space<vmem>>, vector<128x128xbf16>
    %cst_14 = arith.constant dense<0.000000e+00> : vector<8x128xf32>
    %19 = tpu.matmul %17, %18, %cst_14 {dimension_numbers = #tpu.dot_dimension_numbers<[1], [0], [0], [1], [0, 0, 1, 1], [], []>} : vector<8x128xbf16>, vector<128x128xbf16>, vector<8x128xf32> -> vector<8x128xf32>
    %c0_15 = arith.constant 0 : index
    %c0_16 = arith.constant 0 : index
    %20 = vector.load %arg7[%c0_15, %c0_16] : memref<1x128xf32, #tpu.memory_space<vmem>>, vector<1x128xf32>
    %21 = vector.broadcast %20 : vector<1x128xf32> to vector<8x128xf32>
    %22 = arith.addf %19, %21 : vector<8x128xf32>
    %c0_17 = arith.constant 0 : index
    %c0_18 = arith.constant 0 : index
    %23 = vector.load %arg8[%c0_17, %c0_18] : memref<8x128xf32, #tpu.memory_space<vmem>>, vector<8x128xf32>
    tpu.vector_store %arg8[%c0_17, %c0_18], %22 {strides = array<i32>} : memref<8x128xf32, #tpu.memory_space<vmem>>, vector<8x128xf32>,
    return
  }
  func.func @transform_0(%arg0: i32) -> (i32, i32) {
    %c0_i32 = arith.constant 0 : i32
    %c0_i32_0 = arith.constant 0 : i32
    return %arg0, %c0_i32 : i32, i32
  }
  func.func @transform_1(%arg0: i32) -> (i32, i32) {
    %c0_i32 = arith.constant 0 : i32
    %c0_i32_0 = arith.constant 0 : i32
    %c0_i32_1 = arith.constant 0 : i32
    return %c0_i32, %c0_i32_0 : i32, i32
  }
  func.func @transform_2(%arg0: i32) -> (i32, i32) {
    %c0_i32 = arith.constant 0 : i32
    %c0_i32_0 = arith.constant 0 : i32
    %c0_i32_1 = arith.constant 0 : i32
    return %c0_i32, %c0_i32_0 : i32, i32
  }
  func.func @transform_3(%arg0: i32) -> (i32, i32) {
    %c0_i32 = arith.constant 0 : i32
    %c0_i32_0 = arith.constant 0 : i32
    %c0_i32_1 = arith.constant 0 : i32
    return %c0_i32, %c0_i32_0 : i32, i32
  }
  func.func @transform_4(%arg0: i32) -> (i32, i32) {
    %c0_i32 = arith.constant 0 : i32
    %c0_i32_0 = arith.constant 0 : i32
    %c0_i32_1 = arith.constant 0 : i32
    return %c0_i32, %c0_i32_0 : i32, i32
  }
  func.func @transform_5(%arg0: i32) -> (i32, i32) {
    %c0_i32 = arith.constant 0 : i32
    %c0_i32_0 = arith.constant 0 : i32
    %c0_i32_1 = arith.constant 0 : i32
    return %c0_i32, %c0_i32_0 : i32, i32
  }
  func.func @transform_6(%arg0: i32) -> (i32, i32) {
    %c0_i32 = arith.constant 0 : i32
    %c0_i32_0 = arith.constant 0 : i32
    %c0_i32_1 = arith.constant 0 : i32
    return %c0_i32, %c0_i32_0 : i32, i32
  }
  func.func @transform_7(%arg0: i32) -> (i32, i32) {
    %c0_i32 = arith.constant 0 : i32
    %c0_i32_0 = arith.constant 0 : i32
    return %arg0, %c0_i32 : i32, i32
  }
}

</mosaic_0001>

<llo_original>
// kernel: mlp_with_uncertainty_forward.1
$region0: #{mlp_with_uncertainty_forward.1}
  #allocation0 [shape = 'u32[]', space=smem, size = 0x4, offset = 0x4, fixed_abs, tag = 'smem constant byte address 0x4 - core index']
  #allocation1 [shape = 'u32[144,128]{1,0:T(1,128)}', space=vmem, size = 0x12000, scoped, tag = 'internal scratch']
  %s0 = inlined_call_operand.hbm [shape: f32[8,42], index: 0, kind: input, shape index: {}]
  %s1 = inlined_call_operand.hbm [shape: bf16[42,1024], index: 1, kind: input, shape index: {}]
  %s2 = inlined_call_operand.vmem [shape: f32[1,1024], index: 2, kind: input, shape index: {}]
  %s3 = inlined_call_operand.hbm [shape: bf16[1024,128], index: 3, kind: input, shape index: {}]
  %s4 = inlined_call_operand.vmem [shape: f32[1,128], index: 4, kind: input, shape index: {}]
  %s5 = inlined_call_operand.hbm [shape: bf16[128,128], index: 5, kind: input, shape index: {}]
  %s6 = inlined_call_operand.hbm [shape: f32[1,128], index: 6, kind: input, shape index: {}]
  %s7 = inlined_call_operand.vmem [shape: f32[8,128], index: 7, kind: output, shape index: {}]
  %s8 = sld [smem:[#allocation0]]
  $region58: #{mlp_with_uncertainty_forward.1} parent=0
    _
  %s10 = ssub.s32 1, %s8
  %s11 = scalar_select 0, %s10, %s8
  $region1: #{mlp_with_uncertainty_forward.1} parent=0
    #allocation2 [shape = 'u8[4096]{0}', space=vmem, size = 0x1000, scoped, tag = 'input window, operand 0, single buffered']
    #allocation3 [shape = 's32[1]{0}', space=sflag, size = 0x4, scoped, tag = 'scoped memory for mlp_with_uncertainty_forward.1']
    #allocation4 [shape = 'u8[98304]{0}', space=vmem, size = 0x18000, scoped, tag = 'input window, operand 1, single buffered']
    #allocation5 [shape = 's32[1]{0}', space=sflag, size = 0x4, scoped, tag = 'scoped memory for mlp_with_uncertainty_forward.1']
    #allocation6 [shape = 'u8[262144]{0}', space=vmem, size = 0x40000, scoped, tag = 'input window, operand 3, single buffered']
    #allocation7 [shape = 'u8[32768]{0}', space=vmem, size = 0x8000, scoped, tag = 'input window, operand 5, single buffered']
    #allocation8 [shape = 's32[1]{0}', space=sflag, size = 0x4, scoped, tag = 'scoped memory for mlp_with_uncertainty_forward.1']
    #allocation9 [shape = 'u8[512]{0}', space=vmem, size = 0x400, scoped, tag = 'input window, operand 6, single buffered']
    %12 = vsyncpa [#allocation3], 0
    %13 = vsyncpa [#allocation5], 0
    %14 = vsyncpa [#allocation8], 0
    // Predicated region
    $region2: #{mlp_with_uncertainty_forward.1} parent=1 // pred_check
      _
    $region3: #{mlp_with_uncertainty_forward.1} parent=1 // pred_check_branch
      %16 = sbr.rel (0) target = $region5
    $region4: #{mlp_with_uncertainty_forward.1} parent=1 // pred_region
      %s18 = ssub.s32 128, 128
      %19 = vsyncadd [#allocation3], %s18
      %s21 = sshll.u32 [#allocation2], 4
      %s22 = int_to_ptr.vmem [resolvable:$true] %s21
      %24 = dma.hbm_to_vmem [thread:$0]  %s0, 128, %s22, [#allocation3]
    $region5: #{mlp_with_uncertainty_forward.1} parent=1 // pred_fallthru
      _
    // Predicated region
    $region6: #{mlp_with_uncertainty_forward.1} parent=1 // pred_check
      _
    $region7: #{mlp_with_uncertainty_forward.1} parent=1 // pred_check_branch
      %26 = sbr.rel (0) target = $region9
    $region8: #{mlp_with_uncertainty_forward.1} parent=1 // pred_region
      %s28 = ssub.s32 3072, 3072
      %29 = vsyncadd [#allocation5], %s28
      %s30 = sshll.u32 [#allocation4], 4
      %s31 = int_to_ptr.vmem [resolvable:$true] %s30
      %36 = dma.hbm_to_vmem [thread:$0]  %s1, 3072, %s31, [#allocation5], 512, 512, 32
    $region9: #{mlp_with_uncertainty_forward.1} parent=1 // pred_fallthru
      _
    // Predicated region
    $region10: #{mlp_with_uncertainty_forward.1} parent=1 // pred_check
      _
    $region11: #{mlp_with_uncertainty_forward.1} parent=1 // pred_check_branch
      %38 = sbr.rel (0) target = $region13
    $region12: #{mlp_with_uncertainty_forward.1} parent=1 // pred_region
      _
    $region13: #{mlp_with_uncertainty_forward.1} parent=1 // pred_fallthru
      _
    // Predicated region
    $region14: #{mlp_with_uncertainty_forward.1} parent=1 // pred_check
      _
    $region15: #{mlp_with_uncertainty_forward.1} parent=1 // pred_check_branch
      %40 = sbr.rel (0) target = $region17
    $region16: #{mlp_with_uncertainty_forward.1} parent=1 // pred_region
      %s42 = ssub.s32 8192, 8192
      %43 = vsyncadd [#allocation5], %s42
      %s44 = sshll.u32 [#allocation6], 4
      %s45 = int_to_ptr.vmem [resolvable:$true] %s44
      %50 = dma.hbm_to_vmem [thread:$0]  %s3, 8192, %s45, [#allocation5], 64, 64, 4
    $region17: #{mlp_with_uncertainty_forward.1} parent=1 // pred_fallthru
      _
    // Predicated region
    $region18: #{mlp_with_uncertainty_forward.1} parent=1 // pred_check
      _
    $region19: #{mlp_with_uncertainty_forward.1} parent=1 // pred_check_branch
      %52 = sbr.rel (0) target = $region21
    $region20: #{mlp_with_uncertainty_forward.1} parent=1 // pred_region
      _
    $region21: #{mlp_with_uncertainty_forward.1} parent=1 // pred_fallthru
      _
    // Predicated region
    $region22: #{mlp_with_uncertainty_forward.1} parent=1 // pred_check
      _
    $region23: #{mlp_with_uncertainty_forward.1} parent=1 // pred_check_branch
      %54 = sbr.rel (0) target = $region25
    $region24: #{mlp_with_uncertainty_forward.1} parent=1 // pred_region
      %s56 = ssub.s32 1024, 1024
      %57 = vsyncadd [#allocation8], %s56
      %s58 = sshll.u32 [#allocation7], 4
      %s59 = int_to_ptr.vmem [resolvable:$true] %s58
      %64 = dma.hbm_to_vmem [thread:$0]  %s5, 1024, %s59, [#allocation8], 64, 64, 4
    $region25: #{mlp_with_uncertainty_forward.1} parent=1 // pred_fallthru
      _
    // Predicated region
    $region26: #{mlp_with_uncertainty_forward.1} parent=1 // pred_check
      _
    $region27: #{mlp_with_uncertainty_forward.1} parent=1 // pred_check_branch
      %66 = sbr.rel (0) target = $region29
    $region28: #{mlp_with_uncertainty_forward.1} parent=1 // pred_region
      %s68 = ssub.s32 16, 16
      %69 = vsyncadd [#allocation8], %s68
      %s71 = sshll.u32 [#allocation9], 4
      %s72 = int_to_ptr.vmem [resolvable:$true] %s71
      %74 = dma.hbm_to_vmem [thread:$0]  %s6, 16, %s72, [#allocation8]
    $region29: #{mlp_with_uncertainty_forward.1} parent=1 // pred_fallthru
      _
    // Predicated region
    $region30: #{mlp_with_uncertainty_forward.1} parent=1 // pred_check
      _
    $region31: #{mlp_with_uncertainty_forward.1} parent=1 // pred_check_branch
      %76 = sbr.rel (0) target = $region33
    $region32: #{mlp_with_uncertainty_forward.1} parent=1 // pred_region
      %77 = dma.done [#allocation3], 128
    $region33: #{mlp_with_uncertainty_forward.1} parent=1 // pred_fallthru
      _
    // Predicated region
    $region34: #{mlp_with_uncertainty_forward.1} parent=1 // pred_check
      _
    $region35: #{mlp_with_uncertainty_forward.1} parent=1 // pred_check_branch
      %79 = sbr.rel (0) target = $region37
    $region36: #{mlp_with_uncertainty_forward.1} parent=1 // pred_region
      %80 = dma.done [#allocation5], 3072
    $region37: #{mlp_with_uncertainty_forward.1} parent=1 // pred_fallthru
      _
    // Predicated region
    $region38: #{mlp_with_uncertainty_forward.1} parent=1 // pred_check
      _
    $region39: #{mlp_with_uncertainty_forward.1} parent=1 // pred_check_branch
      %82 = sbr.rel (0) target = $region41
    $region40: #{mlp_with_uncertainty_forward.1} parent=1 // pred_region
      %83 = dma.done [#allocation5], 8192
    $region41: #{mlp_with_uncertainty_forward.1} parent=1 // pred_fallthru
      _
    // Predicated region
    $region42: #{mlp_with_uncertainty_forward.1} parent=1 // pred_check
      _
    $region43: #{mlp_with_uncertainty_forward.1} parent=1 // pred_check_branch
      %85 = sbr.rel (0) target = $region45
    $region44: #{mlp_with_uncertainty_forward.1} parent=1 // pred_region
      %86 = dma.done [#allocation8], 1024
    $region45: #{mlp_with_uncertainty_forward.1} parent=1 // pred_fallthru
      _
    // Predicated region
    $region46: #{mlp_with_uncertainty_forward.1} parent=1 // pred_check
      _
    $region47: #{mlp_with_uncertainty_forward.1} parent=1 // pred_check_branch
      %88 = sbr.rel (0) target = $region49
    $region48: #{mlp_with_uncertainty_forward.1} parent=1 // pred_region
      %89 = dma.done [#allocation8], 16
    $region49: #{mlp_with_uncertainty_forward.1} parent=1 // pred_fallthru
      _
    %v91 = vld [vmem:[#allocation2] sm:$0xff]
    %v92 = vpack.c.bf16 %v91, %v91
    %v93 = vld [vmem:[#allocation4] sm:$0xff]
    %v94 = vld [vmem:[#allocation4 + $0x8] sm:$0xff]
    %v95 = vld [vmem:[#allocation4 + $0x10] sm:$0xff]
    %v96 = vld [vmem:[#allocation4 + $0x18] sm:$0xff]
    %v97 = vld [vmem:[#allocation4 + $0x20] sm:$0xff]
    %v98 = vld [vmem:[#allocation4 + $0x28] sm:$0xff]
    %v99 = vld [vmem:[#allocation4 + $0x30] sm:$0xff]
    %v100 = vld [vmem:[#allocation4 + $0x38] sm:$0xff]
    %v101 = vld [vmem:[#allocation4 + $0x40] sm:$0xff]
    %v102 = vld [vmem:[#allocation4 + $0x48] sm:$0xff]
    %v103 = vld [vmem:[#allocation4 + $0x50] sm:$0xff]
    %v104 = vld [vmem:[#allocation4 + $0x58] sm:$0xff]
    %v105 = vld [vmem:[#allocation4 + $0x60] sm:$0xff]
    %v106 = vld [vmem:[#allocation4 + $0x68] sm:$0xff]
    %v107 = vld [vmem:[#allocation4 + $0x70] sm:$0xff]
    %v108 = vld [vmem:[#allocation4 + $0x78] sm:$0xff]
    %v109 = vld [vmem:[#allocation4 + $0x80] sm:$0xff]
    %v110 = vld [vmem:[#allocation4 + $0x88] sm:$0xff]
    %v111 = vld [vmem:[#allocation4 + $0x90] sm:$0xff]
    %v112 = vld [vmem:[#allocation4 + $0x98] sm:$0xff]
    %v113 = vld [vmem:[#allocation4 + $0xa0] sm:$0x11]
    %v114 = vld [vmem:[#allocation4 + $0xa8] sm:$0x11]
    %v115 = vld [vmem:[#allocation4 + $0xb0] sm:$0x11]
    %v116 = vld [vmem:[#allocation4 + $0xb8] sm:$0x11]
    %v117 = vld [vmem:[%s2] sm:$0xff]
    %v119 = vlaneseq
    %v120 = vshrl.u32 %v119, 7
    %v121 = vsub.s32 0, %v120
    %v122 = vrot.slane %v117, %v121
    %v123 = vlaneseq
    %v124 = vshrl.u32 %v123, 7
    %v125 = vsub.s32 1, %v124
    %v126 = vrot.slane %v117, %v125
    %v127 = vlaneseq
    %v128 = vshrl.u32 %v127, 7
    %v129 = vsub.s32 2, %v128
    %v130 = vrot.slane %v117, %v129
    %v131 = vlaneseq
    %v132 = vshrl.u32 %v131, 7
    %v133 = vsub.s32 3, %v132
    %v134 = vrot.slane %v117, %v133
    %v135 = vlaneseq
    %v136 = vshrl.u32 %v135, 7
    %v137 = vsub.s32 4, %v136
    %v138 = vrot.slane %v117, %v137
    %v139 = vlaneseq
    %v140 = vshrl.u32 %v139, 7
    %v141 = vsub.s32 5, %v140
    %v142 = vrot.slane %v117, %v141
    %v143 = vlaneseq
    %v144 = vshrl.u32 %v143, 7
    %v145 = vsub.s32 6, %v144
    %v146 = vrot.slane %v117, %v145
    %v147 = vlaneseq
    %v148 = vshrl.u32 %v147, 7
    %v149 = vsub.s32 7, %v148
    %v150 = vrot.slane %v117, %v149
    %v183 = vunpack.c.l.b16 %v93
    %v184 = vunpack.c.h.b16 %v93
    %v185 = vunpack.c.l.b16 %v94
    %v186 = vunpack.c.h.b16 %v94
    %v187 = vunpack.c.l.b16 %v95
    %v188 = vunpack.c.h.b16 %v95
    %v189 = vunpack.c.l.b16 %v96
    %v190 = vunpack.c.h.b16 %v96
    %v191 = vunpack.c.l.b16 %v97
    %v192 = vunpack.c.h.b16 %v97
    %v193 = vunpack.c.l.b16 %v98
    %v194 = vunpack.c.h.b16 %v98
    %v195 = vunpack.c.l.b16 %v99
    %v196 = vunpack.c.h.b16 %v99
    %v197 = vunpack.c.l.b16 %v100
    %v198 = vunpack.c.h.b16 %v100
    %v199 = vunpack.c.l.b16 %v101
    %v200 = vunpack.c.h.b16 %v101
    %v201 = vunpack.c.l.b16 %v102
    %v202 = vunpack.c.h.b16 %v102
    %v203 = vunpack.c.l.b16 %v103
    %v204 = vunpack.c.h.b16 %v103
    %v205 = vunpack.c.l.b16 %v104
    %v206 = vunpack.c.h.b16 %v104
    %v207 = vunpack.c.l.b16 %v105
    %v208 = vunpack.c.h.b16 %v105
    %v209 = vunpack.c.l.b16 %v106
    %v210 = vunpack.c.h.b16 %v106
    %v211 = vunpack.c.l.b16 %v107
    %v212 = vunpack.c.h.b16 %v107
    %v213 = vunpack.c.l.b16 %v108
    %v214 = vunpack.c.h.b16 %v108
    %v215 = vunpack.c.l.b16 %v109
    %v216 = vunpack.c.h.b16 %v109
    %v217 = vunpack.c.l.b16 %v110
    %v218 = vunpack.c.h.b16 %v110
    %v219 = vunpack.c.l.b16 %v111
    %v220 = vunpack.c.h.b16 %v111
    %v221 = vunpack.c.l.b16 %v112
    %v222 = vunpack.c.h.b16 %v112
    %v223 = vunpack.c.l.b16 %v113
    %v224 = vunpack.c.h.b16 %v113
    %v225 = vunpack.c.l.b16 %v114
    %v226 = vunpack.c.h.b16 %v114
    %v227 = vunpack.c.l.b16 %v115
    %v228 = vunpack.c.h.b16 %v115
    %v229 = vunpack.c.l.b16 %v116
    %v230 = vunpack.c.h.b16 %v116
    %v231 = vpack.c.b16 %v191, %v183
    %v232 = vpack.c.b16 %v192, %v184
    %v233 = vpack.c.b16 %v193, %v185
    %v234 = vpack.c.b16 %v194, %v186
    %v235 = vpack.c.b16 %v195, %v187
    %v236 = vpack.c.b16 %v196, %v188
    %v237 = vpack.c.b16 %v197, %v189
    %v238 = vpack.c.b16 %v198, %v190
    %v239 = vpack.c.b16 %v207, %v199
    %v240 = vpack.c.b16 %v208, %v200
    %v241 = vpack.c.b16 %v209, %v201
    %v242 = vpack.c.b16 %v210, %v202
    %v243 = vpack.c.b16 %v211, %v203
    %v244 = vpack.c.b16 %v212, %v204
    %v245 = vpack.c.b16 %v213, %v205
    %v246 = vpack.c.b16 %v214, %v206
    %v247 = vpack.c.b16 %v223, %v215
    %v248 = vpack.c.b16 %v224, %v216
    %v249 = vpack.c.b16 %v225, %v217
    %v250 = vpack.c.b16 %v226, %v218
    %v251 = vpack.c.b16 %v227, %v219
    %v252 = vpack.c.b16 %v228, %v220
    %v253 = vpack.c.b16 %v229, %v221
    %v254 = vpack.c.b16 %v230, %v222
    %vm271 = vcmask 343040
    %v273 = vsel %vm271, %v92, 0
    %vm275 = vcmask 1044480
    %v277 = vsel %vm275, %v247, 0
    %v280 = vsel %vm275, %v248, 0
    %v283 = vsel %vm275, %v249, 0
    %v286 = vsel %vm275, %v250, 0
    %v289 = vsel %vm275, %v251, 0
    %v292 = vsel %vm275, %v252, 0
    %v295 = vsel %vm275, %v253, 0
    %v298 = vsel %vm275, %v254, 0
    %300 = vmatprep.subr.bf16.mxu0 0
    %301 = vmatpush1.bf16.msra.mxu0 0
    %302 = vmatprep.subr.bf16.mxu0 0
    %303 = vmatpush1.bf16.msra.mxu0 0
    %304 = vmatprep.subr.bf16.mxu0 0
    %305 = vmatpush1.bf16.msra.mxu0 0
    %306 = vmatprep.subr.bf16.mxu0 0
    %307 = vmatpush1.bf16.msra.mxu0 0
    %308 = vmatprep.subr.bf16.mxu0 0
    %309 = vmatpush1.bf16.msra.mxu0 0
    %310 = vmatprep.subr.bf16.mxu0 %v280
    %311 = vmatpush1.bf16.msra.mxu0 %v277
    %312 = vmatprep.subr.bf16.mxu0 %v240
    %313 = vmatpush1.bf16.msra.mxu0 %v239
    %314 = vmatprep.subr.bf16.mxu0 %v232
    %315 = vmatpush1.bf16.msra.mxu0 %v231
    %316 = vmatprep.subr.bf16.mxu0 0
    %317 = vmatpush2.bf16.msra.mxu0 0
    %318 = vmatprep.subr.bf16.mxu0 0
    %319 = vmatpush2.bf16.msra.mxu0 0
    %320 = vmatprep.subr.bf16.mxu0 0
    %321 = vmatpush2.bf16.msra.mxu0 0
    %322 = vmatprep.subr.bf16.mxu0 0
    %323 = vmatpush2.bf16.msra.mxu0 0
    %324 = vmatprep.subr.bf16.mxu0 0
    %325 = vmatpush2.bf16.msra.mxu0 0
    %326 = vmatprep.subr.bf16.mxu0 0
    %327 = vmatpush2.bf16.msra.mxu0 0
    %328 = vmatprep.subr.bf16.mxu0 0
    %329 = vmatpush2.bf16.msra.mxu0 0
    %330 = vmatprep.subr.bf16.mxu0 0
    %331 = vmatpush2.bf16.msra.mxu0 0
    %332 = vmatprep.mubr.bf16.mxu0 0
    %333 = vmatmul.mubr.bf16.gmra.mxu0 %v273
    %v334 = vpop.f32.mrf.mxu0
    %v335 = vadd.f32 %v122, %v334
    %v336 = vpop.f32.mrf.mxu0
    %v337 = vadd.f32 %v126, %v336
    %v338 = vpop.f32.mrf.mxu0
    %v339 = vpop.f32.mrf.mxu0
    %340 = vdwg.mxu0
    %341 = vmatprep.subr.bf16.mxu0 0
    %342 = vmatpush1.bf16.msra.mxu0 0
    %343 = vmatprep.subr.bf16.mxu0 0
    %344 = vmatpush1.bf16.msra.mxu0 0
    %345 = vmatprep.subr.bf16.mxu0 0
    %346 = vmatpush1.bf16.msra.mxu0 0
    %347 = vmatprep.subr.bf16.mxu0 0
    %348 = vmatpush1.bf16.msra.mxu0 0
    %349 = vmatprep.subr.bf16.mxu0 0
    %350 = vmatpush1.bf16.msra.mxu0 0
    %351 = vmatprep.subr.bf16.mxu0 %v286
    %352 = vmatpush1.bf16.msra.mxu0 %v283
    %353 = vmatprep.subr.bf16.mxu0 %v242
    %354 = vmatpush1.bf16.msra.mxu0 %v241
    %355 = vmatprep.subr.bf16.mxu0 %v234
    %356 = vmatpush1.bf16.msra.mxu0 %v233
    %357 = vmatprep.subr.bf16.mxu0 0
    %358 = vmatpush2.bf16.msra.mxu0 0
    %359 = vmatprep.subr.bf16.mxu0 0
    %360 = vmatpush2.bf16.msra.mxu0 0
    %361 = vmatprep.subr.bf16.mxu0 0
    %362 = vmatpush2.bf16.msra.mxu0 0
    %363 = vmatprep.subr.bf16.mxu0 0
    %364 = vmatpush2.bf16.msra.mxu0 0
    %365 = vmatprep.subr.bf16.mxu0 0
    %366 = vmatpush2.bf16.msra.mxu0 0
    %367 = vmatprep.subr.bf16.mxu0 0
    %368 = vmatpush2.bf16.msra.mxu0 0
    %369 = vmatprep.subr.bf16.mxu0 0
    %370 = vmatpush2.bf16.msra.mxu0 0
    %371 = vmatprep.subr.bf16.mxu0 0
    %372 = vmatpush2.bf16.msra.mxu0 0
    %373 = vmatprep.mubr.bf16.mxu0 0
    %374 = vmatmul.mubr.bf16.gmra.mxu0 %v273
    %v375 = vpop.f32.mrf.mxu0
    %v376 = vadd.f32 %v130, %v375
    %v377 = vpop.f32.mrf.mxu0
    %v378 = vadd.f32 %v134, %v377
    %v379 = vpop.f32.mrf.mxu0
    %v380 = vpop.f32.mrf.mxu0
    %381 = vdwg.mxu0
    %382 = vmatprep.subr.bf16.mxu0 0
    %383 = vmatpush1.bf16.msra.mxu0 0
    %384 = vmatprep.subr.bf16.mxu0 0
    %385 = vmatpush1.bf16.msra.mxu0 0
    %386 = vmatprep.subr.bf16.mxu0 0
    %387 = vmatpush1.bf16.msra.mxu0 0
    %388 = vmatprep.subr.bf16.mxu0 0
    %389 = vmatpush1.bf16.msra.mxu0 0
    %390 = vmatprep.subr.bf16.mxu0 0
    %391 = vmatpush1.bf16.msra.mxu0 0
    %392 = vmatprep.subr.bf16.mxu0 %v292
    %393 = vmatpush1.bf16.msra.mxu0 %v289
    %394 = vmatprep.subr.bf16.mxu0 %v244
    %395 = vmatpush1.bf16.msra.mxu0 %v243
    %396 = vmatprep.subr.bf16.mxu0 %v236
    %397 = vmatpush1.bf16.msra.mxu0 %v235
    %398 = vmatprep.subr.bf16.mxu0 0
    %399 = vmatpush2.bf16.msra.mxu0 0
    %400 = vmatprep.subr.bf16.mxu0 0
    %401 = vmatpush2.bf16.msra.mxu0 0
    %402 = vmatprep.subr.bf16.mxu0 0
    %403 = vmatpush2.bf16.msra.mxu0 0
    %404 = vmatprep.subr.bf16.mxu0 0
    %405 = vmatpush2.bf16.msra.mxu0 0
    %406 = vmatprep.subr.bf16.mxu0 0
    %407 = vmatpush2.bf16.msra.mxu0 0
    %408 = vmatprep.subr.bf16.mxu0 0
    %409 = vmatpush2.bf16.msra.mxu0 0
    %410 = vmatprep.subr.bf16.mxu0 0
    %411 = vmatpush2.bf16.msra.mxu0 0
    %412 = vmatprep.subr.bf16.mxu0 0
    %413 = vmatpush2.bf16.msra.mxu0 0
    %414 = vmatprep.mubr.bf16.mxu0 0
    %415 = vmatmul.mubr.bf16.gmra.mxu0 %v273
    %v416 = vpop.f32.mrf.mxu0
    %v417 = vadd.f32 %v138, %v416
    %v418 = vpop.f32.mrf.mxu0
    %v419 = vadd.f32 %v142, %v418
    %v420 = vpop.f32.mrf.mxu0
    %v421 = vpop.f32.mrf.mxu0
    %422 = vdwg.mxu0
    %423 = vmatprep.subr.bf16.mxu0 0
    %424 = vmatpush1.bf16.msra.mxu0 0
    %425 = vmatprep.subr.bf16.mxu0 0
    %426 = vmatpush1.bf16.msra.mxu0 0
    %427 = vmatprep.subr.bf16.mxu0 0
    %428 = vmatpush1.bf16.msra.mxu0 0
    %429 = vmatprep.subr.bf16.mxu0 0
    %430 = vmatpush1.bf16.msra.mxu0 0
    %431 = vmatprep.subr.bf16.mxu0 0
    %432 = vmatpush1.bf16.msra.mxu0 0
    %433 = vmatprep.subr.bf16.mxu0 %v298
    %434 = vmatpush1.bf16.msra.mxu0 %v295
    %435 = vmatprep.subr.bf16.mxu0 %v246
    %436 = vmatpush1.bf16.msra.mxu0 %v245
    %437 = vmatprep.subr.bf16.mxu0 %v238
    %438 = vmatpush1.bf16.msra.mxu0 %v237
    %439 = vmatprep.subr.bf16.mxu0 0
    %440 = vmatpush2.bf16.msra.mxu0 0
    %441 = vmatprep.subr.bf16.mxu0 0
    %442 = vmatpush2.bf16.msra.mxu0 0
    %443 = vmatprep.subr.bf16.mxu0 0
    %444 = vmatpush2.bf16.msra.mxu0 0
    %445 = vmatprep.subr.bf16.mxu0 0
    %446 = vmatpush2.bf16.msra.mxu0 0
    %447 = vmatprep.subr.bf16.mxu0 0
    %448 = vmatpush2.bf16.msra.mxu0 0
    %449 = vmatprep.subr.bf16.mxu0 0
    %450 = vmatpush2.bf16.msra.mxu0 0
    %451 = vmatprep.subr.bf16.mxu0 0
    %452 = vmatpush2.bf16.msra.mxu0 0
    %453 = vmatprep.subr.bf16.mxu0 0
    %454 = vmatpush2.bf16.msra.mxu0 0
    %455 = vmatprep.mubr.bf16.mxu0 0
    %456 = vmatmul.mubr.bf16.gmra.mxu0 %v273
    %v457 = vpop.f32.mrf.mxu0
    %v458 = vadd.f32 %v146, %v457
    %v459 = vpop.f32.mrf.mxu0
    %v460 = vadd.f32 %v150, %v459
    %v461 = vpop.f32.mrf.mxu0
    %v462 = vpop.f32.mrf.mxu0
    %463 = vdwg.mxu0
    %v464 = vmax.f32 %v335, 0.0
    %v465 = vmax.f32 %v337, 0.0
    %v466 = vmax.f32 %v376, 0.0
    %v467 = vmax.f32 %v378, 0.0
    %v468 = vmax.f32 %v417, 0.0
    %v469 = vmax.f32 %v419, 0.0
    %v470 = vmax.f32 %v458, 0.0
    %v471 = vmax.f32 %v460, 0.0
    %v472 = vpack.c.bf16 %v464, %v464
    %v473 = vpack.c.bf16 %v465, %v465
    %v474 = vpack.c.bf16 %v466, %v466
    %v475 = vpack.c.bf16 %v467, %v467
    %v476 = vpack.c.bf16 %v468, %v468
    %v477 = vpack.c.bf16 %v469, %v469
    %v478 = vpack.c.bf16 %v470, %v470
    %v479 = vpack.c.bf16 %v471, %v471
    %v480 = vld [vmem:[#allocation6] sm:$0xf]
    %v481 = vld [vmem:[#allocation6 + $0x4] sm:$0xf]
    %v482 = vld [vmem:[#allocation6 + $0x8] sm:$0xf]
    %v483 = vld [vmem:[#allocation6 + $0xc] sm:$0xf]
    %v484 = vld [vmem:[#allocation6 + $0x10] sm:$0xf]
    %v485 = vld [vmem:[#allocation6 + $0x14] sm:$0xf]
    %v486 = vld [vmem:[#allocation6 + $0x18] sm:$0xf]
    %v487 = vld [vmem:[#allocation6 + $0x1c] sm:$0xf]
    %v488 = vld [vmem:[#allocation6 + $0x20] sm:$0xf]
    %v489 = vld [vmem:[#allocation6 + $0x24] sm:$0xf]
    %v490 = vld [vmem:[#allocation6 + $0x28] sm:$0xf]
    %v491 = vld [vmem:[#allocation6 + $0x2c] sm:$0xf]
    %v492 = vld [vmem:[#allocation6 + $0x30] sm:$0xf]
    %v493 = vld [vmem:[#allocation6 + $0x34] sm:$0xf]
    %v494 = vld [vmem:[#allocation6 + $0x38] sm:$0xf]
    %v495 = vld [vmem:[#allocation6 + $0x3c] sm:$0xf]
    %v496 = vld [vmem:[#allocation6 + $0x40] sm:$0xf]
    %v497 = vld [vmem:[#allocation6 + $0x44] sm:$0xf]
    %v498 = vld [vmem:[#allocation6 + $0x48] sm:$0xf]
    %v499 = vld [vmem:[#allocation6 + $0x4c] sm:$0xf]
    %v500 = vld [vmem:[#allocation6 + $0x50] sm:$0xf]
    %v501 = vld [vmem:[#allocation6 + $0x54] sm:$0xf]
    %v502 = vld [vmem:[#allocation6 + $0x58] sm:$0xf]
    %v503 = vld [vmem:[#allocation6 + $0x5c] sm:$0xf]
    %v504 = vld [vmem:[#allocation6 + $0x60] sm:$0xf]
    %v505 = vld [vmem:[#allocation6 + $0x64] sm:$0xf]
    %v506 = vld [vmem:[#allocation6 + $0x68] sm:$0xf]
    %v507 = vld [vmem:[#allocation6 + $0x6c] sm:$0xf]
    %v508 = vld [vmem:[#allocation6 + $0x70] sm:$0xf]
    %v509 = vld [vmem:[#allocation6 + $0x74] sm:$0xf]
    %v510 = vld [vmem:[#allocation6 + $0x78] sm:$0xf]
    %v511 = vld [vmem:[#allocation6 + $0x7c] sm:$0xf]
    %v512 = vld [vmem:[#allocation6 + $0x80] sm:$0xf]
    %v513 = vld [vmem:[#allocation6 + $0x84] sm:$0xf]
    %v514 = vld [vmem:[#allocation6 + $0x88] sm:$0xf]
    %v515 = vld [vmem:[#allocation6 + $0x8c] sm:$0xf]
    %v516 = vld [vmem:[#allocation6 + $0x90] sm:$0xf]
    %v517 = vld [vmem:[#allocation6 + $0x94] sm:$0xf]
    %v518 = vld [vmem:[#allocation6 + $0x98] sm:$0xf]
    %v519 = vld [vmem:[#allocation6 + $0x9c] sm:$0xf]
    %v520 = vld [vmem:[#allocation6 + $0xa0] sm:$0xf]
    %v521 = vld [vmem:[#allocation6 + $0xa4] sm:$0xf]
    %v522 = vld [vmem:[#allocation6 + $0xa8] sm:$0xf]
    %v523 = vld [vmem:[#allocation6 + $0xac] sm:$0xf]
    %v524 = vld [vmem:[#allocation6 + $0xb0] sm:$0xf]
    %v525 = vld [vmem:[#allocation6 + $0xb4] sm:$0xf]
    %v526 = vld [vmem:[#allocation6 + $0xb8] sm:$0xf]
    %v527 = vld [vmem:[#allocation6 + $0xbc] sm:$0xf]
    %v528 = vld [vmem:[#allocation6 + $0xc0] sm:$0xf]
    %v529 = vld [vmem:[#allocation6 + $0xc4] sm:$0xf]
    %v530 = vld [vmem:[#allocation6 + $0xc8] sm:$0xf]
    %v531 = vld [vmem:[#allocation6 + $0xcc] sm:$0xf]
    %v532 = vld [vmem:[#allocation6 + $0xd0] sm:$0xf]
    %v533 = vld [vmem:[#allocation6 + $0xd4] sm:$0xf]
    %v534 = vld [vmem:[#allocation6 + $0xd8] sm:$0xf]
    %v535 = vld [vmem:[#allocation6 + $0xdc] sm:$0xf]
    %v536 = vld [vmem:[#allocation6 + $0xe0] sm:$0xf]
    %v537 = vld [vmem:[#allocation6 + $0xe4] sm:$0xf]
    %v538 = vld [vmem:[#allocation6 + $0xe8] sm:$0xf]
    %v539 = vld [vmem:[#allocation6 + $0xec] sm:$0xf]
    %v540 = vld [vmem:[#allocation6 + $0xf0] sm:$0xf]
    %v541 = vld [vmem:[#allocation6 + $0xf4] sm:$0xf]
    %v542 = vld [vmem:[#allocation6 + $0xf8] sm:$0xf]
    %v543 = vld [vmem:[#allocation6 + $0xfc] sm:$0xf]
    %v544 = vld [vmem:[#allocation6 + $0x100] sm:$0xf]
    %v545 = vld [vmem:[#allocation6 + $0x104] sm:$0xf]
    %v546 = vld [vmem:[#allocation6 + $0x108] sm:$0xf]
    %v547 = vld [vmem:[#allocation6 + $0x10c] sm:$0xf]
    %v548 = vld [vmem:[#allocation6 + $0x110] sm:$0xf]
    %v549 = vld [vmem:[#allocation6 + $0x114] sm:$0xf]
    %v550 = vld [vmem:[#allocation6 + $0x118] sm:$0xf]
    %v551 = vld [vmem:[#allocation6 + $0x11c] sm:$0xf]
    %v552 = vld [vmem:[#allocation6 + $0x120] sm:$0xf]
    %v553 = vld [vmem:[#allocation6 + $0x124] sm:$0xf]
    %v554 = vld [vmem:[#allocation6 + $0x128] sm:$0xf]
    %v555 = vld [vmem:[#allocation6 + $0x12c] sm:$0xf]
    %v556 = vld [vmem:[#allocation6 + $0x130] sm:$0xf]
    %v557 = vld [vmem:[#allocation6 + $0x134] sm:$0xf]
    %v558 = vld [vmem:[#allocation6 + $0x138] sm:$0xf]
    %v559 = vld [vmem:[#allocation6 + $0x13c] sm:$0xf]
    %v560 = vld [vmem:[#allocation6 + $0x140] sm:$0xf]
    %v561 = vld [vmem:[#allocation6 + $0x144] sm:$0xf]
    %v562 = vld [vmem:[#allocation6 + $0x148] sm:$0xf]
    %v563 = vld [vmem:[#allocation6 + $0x14c] sm:$0xf]
    %v564 = vld [vmem:[#allocation6 + $0x150] sm:$0xf]
    %v565 = vld [vmem:[#allocation6 + $0x154] sm:$0xf]
    %v566 = vld [vmem:[#allocation6 + $0x158] sm:$0xf]
    %v567 = vld [vmem:[#allocation6 + $0x15c] sm:$0xf]
    %v568 = vld [vmem:[#allocation6 + $0x160] sm:$0xf]
    %v569 = vld [vmem:[#allocation6 + $0x164] sm:$0xf]
    %v570 = vld [vmem:[#allocation6 + $0x168] sm:$0xf]
    %v571 = vld [vmem:[#allocation6 + $0x16c] sm:$0xf]
    %v572 = vld [vmem:[#allocation6 + $0x170] sm:$0xf]
    %v573 = vld [vmem:[#allocation6 + $0x174] sm:$0xf]
    %v574 = vld [vmem:[#allocation6 + $0x178] sm:$0xf]
    %v575 = vld [vmem:[#allocation6 + $0x17c] sm:$0xf]
    %v576 = vld [vmem:[#allocation6 + $0x180] sm:$0xf]
    %v577 = vld [vmem:[#allocation6 + $0x184] sm:$0xf]
    %v578 = vld [vmem:[#allocation6 + $0x188] sm:$0xf]
    %v579 = vld [vmem:[#allocation6 + $0x18c] sm:$0xf]
    %v580 = vld [vmem:[#allocation6 + $0x190] sm:$0xf]
    %v581 = vld [vmem:[#allocation6 + $0x194] sm:$0xf]
    %v582 = vld [vmem:[#allocation6 + $0x198] sm:$0xf]
    %v583 = vld [vmem:[#allocation6 + $0x19c] sm:$0xf]
    %v584 = vld [vmem:[#allocation6 + $0x1a0] sm:$0xf]
    %v585 = vld [vmem:[#allocation6 + $0x1a4] sm:$0xf]
    %v586 = vld [vmem:[#allocation6 + $0x1a8] sm:$0xf]
    %v587 = vld [vmem:[#allocation6 + $0x1ac] sm:$0xf]
    %v588 = vld [vmem:[#allocation6 + $0x1b0] sm:$0xf]
    %v589 = vld [vmem:[#allocation6 + $0x1b4] sm:$0xf]
    %v590 = vld [vmem:[#allocation6 + $0x1b8] sm:$0xf]
    %v591 = vld [vmem:[#allocation6 + $0x1bc] sm:$0xf]
    %v592 = vld [vmem:[#allocation6 + $0x1c0] sm:$0xf]
    %v593 = vld [vmem:[#allocation6 + $0x1c4] sm:$0xf]
    %v594 = vld [vmem:[#allocation6 + $0x1c8] sm:$0xf]
    %v595 = vld [vmem:[#allocation6 + $0x1cc] sm:$0xf]
    %v596 = vld [vmem:[#allocation6 + $0x1d0] sm:$0xf]
    %v597 = vld [vmem:[#allocation6 + $0x1d4] sm:$0xf]
    %v598 = vld [vmem:[#allocation6 + $0x1d8] sm:$0xf]
    %v599 = vld [vmem:[#allocation6 + $0x1dc] sm:$0xf]
    %v600 = vld [vmem:[#allocation6 + $0x1e0] sm:$0xf]
    %v601 = vld [vmem:[#allocation6 + $0x1e4] sm:$0xf]
    %v602 = vld [vmem:[#allocation6 + $0x1e8] sm:$0xf]
    %v603 = vld [vmem:[#allocation6 + $0x1ec] sm:$0xf]
    %v604 = vld [vmem:[#allocation6 + $0x1f0] sm:$0xf]
    %v605 = vld [vmem:[#allocation6 + $0x1f4] sm:$0xf]
    %v606 = vld [vmem:[#allocation6 + $0x1f8] sm:$0xf]
    %v607 = vld [vmem:[#allocation6 + $0x1fc] sm:$0xf]
    %v608 = vld [vmem:[%s4] sm:$0x1]
    %v610 = vlaneseq
    %v611 = vshrl.u32 %v610, 7
    %v612 = vsub.s32 0, %v611
    %v613 = vrot.slane %v608, %v612
    %v743 = vunpack.c.l.b16 %v480
    %v744 = vunpack.c.l.b16 %v481
    %v745 = vunpack.c.l.b16 %v482
    %v746 = vunpack.c.l.b16 %v483
    %v747 = vunpack.c.l.b16 %v484
    %v748 = vunpack.c.l.b16 %v485
    %v749 = vunpack.c.l.b16 %v486
    %v750 = vunpack.c.l.b16 %v487
    %v751 = vunpack.c.l.b16 %v488
    %v752 = vunpack.c.l.b16 %v489
    %v753 = vunpack.c.l.b16 %v490
    %v754 = vunpack.c.l.b16 %v491
    %v755 = vunpack.c.l.b16 %v492
    %v756 = vunpack.c.l.b16 %v493
    %v757 = vunpack.c.l.b16 %v494
    %v758 = vunpack.c.l.b16 %v495
    %v759 = vunpack.c.l.b16 %v496
    %v760 = vunpack.c.l.b16 %v497
    %v761 = vunpack.c.l.b16 %v498
    %v762 = vunpack.c.l.b16 %v499
    %v763 = vunpack.c.l.b16 %v500
    %v764 = vunpack.c.l.b16 %v501
    %v765 = vunpack.c.l.b16 %v502
    %v766 = vunpack.c.l.b16 %v503
    %v767 = vunpack.c.l.b16 %v504
    %v768 = vunpack.c.l.b16 %v505
    %v769 = vunpack.c.l.b16 %v506
    %v770 = vunpack.c.l.b16 %v507
    %v771 = vunpack.c.l.b16 %v508
    %v772 = vunpack.c.l.b16 %v509
    %v773 = vunpack.c.l.b16 %v510
    %v774 = vunpack.c.l.b16 %v511
    %v775 = vunpack.c.l.b16 %v512
    %v776 = vunpack.c.l.b16 %v513
    %v777 = vunpack.c.l.b16 %v514
    %v778 = vunpack.c.l.b16 %v515
    %v779 = vunpack.c.l.b16 %v516
    %v780 = vunpack.c.l.b16 %v517
    %v781 = vunpack.c.l.b16 %v518
    %v782 = vunpack.c.l.b16 %v519
    %v783 = vunpack.c.l.b16 %v520
    %v784 = vunpack.c.l.b16 %v521
    %v785 = vunpack.c.l.b16 %v522
    %v786 = vunpack.c.l.b16 %v523
    %v787 = vunpack.c.l.b16 %v524
    %v788 = vunpack.c.l.b16 %v525
    %v789 = vunpack.c.l.b16 %v526
    %v790 = vunpack.c.l.b16 %v527
    %v791 = vunpack.c.l.b16 %v528
    %v792 = vunpack.c.l.b16 %v529
    %v793 = vunpack.c.l.b16 %v530
    %v794 = vunpack.c.l.b16 %v531
    %v795 = vunpack.c.l.b16 %v532
    %v796 = vunpack.c.l.b16 %v533
    %v797 = vunpack.c.l.b16 %v534
    %v798 = vunpack.c.l.b16 %v535
    %v799 = vunpack.c.l.b16 %v536
    %v800 = vunpack.c.l.b16 %v537
    %v801 = vunpack.c.l.b16 %v538
    %v802 = vunpack.c.l.b16 %v539
    %v803 = vunpack.c.l.b16 %v540
    %v804 = vunpack.c.l.b16 %v541
    %v805 = vunpack.c.l.b16 %v542
    %v806 = vunpack.c.l.b16 %v543
    %v807 = vunpack.c.l.b16 %v544
    %v808 = vunpack.c.l.b16 %v545
    %v809 = vunpack.c.l.b16 %v546
    %v810 = vunpack.c.l.b16 %v547
    %v811 = vunpack.c.l.b16 %v548
    %v812 = vunpack.c.l.b16 %v549
    %v813 = vunpack.c.l.b16 %v550
    %v814 = vunpack.c.l.b16 %v551
    %v815 = vunpack.c.l.b16 %v552
    %v816 = vunpack.c.l.b16 %v553
    %v817 = vunpack.c.l.b16 %v554
    %v818 = vunpack.c.l.b16 %v555
    %v819 = vunpack.c.l.b16 %v556
    %v820 = vunpack.c.l.b16 %v557
    %v821 = vunpack.c.l.b16 %v558
    %v822 = vunpack.c.l.b16 %v559
    %v823 = vunpack.c.l.b16 %v560
    %v824 = vunpack.c.l.b16 %v561
    %v825 = vunpack.c.l.b16 %v562
    %v826 = vunpack.c.l.b16 %v563
    %v827 = vunpack.c.l.b16 %v564
    %v828 = vunpack.c.l.b16 %v565
    %v829 = vunpack.c.l.b16 %v566
    %v830 = vunpack.c.l.b16 %v567
    %v831 = vunpack.c.l.b16 %v568
    %v832 = vunpack.c.l.b16 %v569
    %v833 = vunpack.c.l.b16 %v570
    %v834 = vunpack.c.l.b16 %v571
    %v835 = vunpack.c.l.b16 %v572
    %v836 = vunpack.c.l.b16 %v573
    %v837 = vunpack.c.l.b16 %v574
    %v838 = vunpack.c.l.b16 %v575
    %v839 = vunpack.c.l.b16 %v576
    %v840 = vunpack.c.l.b16 %v577
    %v841 = vunpack.c.l.b16 %v578
    %v842 = vunpack.c.l.b16 %v579
    %v843 = vunpack.c.l.b16 %v580
    %v844 = vunpack.c.l.b16 %v581
    %v845 = vunpack.c.l.b16 %v582
    %v846 = vunpack.c.l.b16 %v583
    %v847 = vunpack.c.l.b16 %v584
    %v848 = vunpack.c.l.b16 %v585
    %v849 = vunpack.c.l.b16 %v586
    %v850 = vunpack.c.l.b16 %v587
    %v851 = vunpack.c.l.b16 %v588
    %v852 = vunpack.c.l.b16 %v589
    %v853 = vunpack.c.l.b16 %v590
    %v854 = vunpack.c.l.b16 %v591
    %v855 = vunpack.c.l.b16 %v592
    %v856 = vunpack.c.l.b16 %v593
    %v857 = vunpack.c.l.b16 %v594
    %v858 = vunpack.c.l.b16 %v595
    %v859 = vunpack.c.l.b16 %v596
    %v860 = vunpack.c.l.b16 %v597
    %v861 = vunpack.c.l.b16 %v598
    %v862 = vunpack.c.l.b16 %v599
    %v863 = vunpack.c.l.b16 %v600
    %v864 = vunpack.c.l.b16 %v601
    %v865 = vunpack.c.l.b16 %v602
    %v866 = vunpack.c.l.b16 %v603
    %v867 = vunpack.c.l.b16 %v604
    %v868 = vunpack.c.l.b16 %v605
    %v869 = vunpack.c.l.b16 %v606
    %v870 = vunpack.c.l.b16 %v607
    %v871 = vpack.c.b16 %v744, %v743
    %v872 = vpack.c.b16 %v746, %v745
    %v873 = vpack.c.b16 %v748, %v747
    %v874 = vpack.c.b16 %v750, %v749
    %v875 = vpack.c.b16 %v752, %v751
    %v876 = vpack.c.b16 %v754, %v753
    %v877 = vpack.c.b16 %v756, %v755
    %v878 = vpack.c.b16 %v758, %v757
    %v879 = vpack.c.b16 %v760, %v759
    %v880 = vpack.c.b16 %v762, %v761
    %v881 = vpack.c.b16 %v764, %v763
    %v882 = vpack.c.b16 %v766, %v765
    %v883 = vpack.c.b16 %v768, %v767
    %v884 = vpack.c.b16 %v770, %v769
    %v885 = vpack.c.b16 %v772, %v771
    %v886 = vpack.c.b16 %v774, %v773
    %v887 = vpack.c.b16 %v776, %v775
    %v888 = vpack.c.b16 %v778, %v777
    %v889 = vpack.c.b16 %v780, %v779
    %v890 = vpack.c.b16 %v782, %v781
    %v891 = vpack.c.b16 %v784, %v783
    %v892 = vpack.c.b16 %v786, %v785
    %v893 = vpack.c.b16 %v788, %v787
    %v894 = vpack.c.b16 %v790, %v789
    %v895 = vpack.c.b16 %v792, %v791
    %v896 = vpack.c.b16 %v794, %v793
    %v897 = vpack.c.b16 %v796, %v795
    %v898 = vpack.c.b16 %v798, %v797
    %v899 = vpack.c.b16 %v800, %v799
    %v900 = vpack.c.b16 %v802, %v801
    %v901 = vpack.c.b16 %v804, %v803
    %v902 = vpack.c.b16 %v806, %v805
    %v903 = vpack.c.b16 %v808, %v807
    %v904 = vpack.c.b16 %v810, %v809
    %v905 = vpack.c.b16 %v812, %v811
    %v906 = vpack.c.b16 %v814, %v813
    %v907 = vpack.c.b16 %v816, %v815
    %v908 = vpack.c.b16 %v818, %v817
    %v909 = vpack.c.b16 %v820, %v819
    %v910 = vpack.c.b16 %v822, %v821
    %v911 = vpack.c.b16 %v824, %v823
    %v912 = vpack.c.b16 %v826, %v825
    %v913 = vpack.c.b16 %v828, %v827
    %v914 = vpack.c.b16 %v830, %v829
    %v915 = vpack.c.b16 %v832, %v831
    %v916 = vpack.c.b16 %v834, %v833
    %v917 = vpack.c.b16 %v836, %v835
    %v918 = vpack.c.b16 %v838, %v837
    %v919 = vpack.c.b16 %v840, %v839
    %v920 = vpack.c.b16 %v842, %v841
    %v921 = vpack.c.b16 %v844, %v843
    %v922 = vpack.c.b16 %v846, %v845
    %v923 = vpack.c.b16 %v848, %v847
    %v924 = vpack.c.b16 %v850, %v849
    %v925 = vpack.c.b16 %v852, %v851
    %v926 = vpack.c.b16 %v854, %v853
    %v927 = vpack.c.b16 %v856, %v855
    %v928 = vpack.c.b16 %v858, %v857
    %v929 = vpack.c.b16 %v860, %v859
    %v930 = vpack.c.b16 %v862, %v861
    %v931 = vpack.c.b16 %v864, %v863
    %v932 = vpack.c.b16 %v866, %v865
    %v933 = vpack.c.b16 %v868, %v867
    %v934 = vpack.c.b16 %v870, %v869
    %999 = vmatprep.subr.bf16.mxu0 0
    %1000 = vmatpush1.bf16.msra.mxu0 %v878
    %1001 = vmatprep.subr.bf16.mxu0 0
    %1002 = vmatpush1.bf16.msra.mxu0 %v877
    %1003 = vmatprep.subr.bf16.mxu0 0
    %1004 = vmatpush1.bf16.msra.mxu0 %v876
    %1005 = vmatprep.subr.bf16.mxu0 0
    %1006 = vmatpush1.bf16.msra.mxu0 %v875
    %1007 = vmatprep.subr.bf16.mxu0 0
    %1008 = vmatpush1.bf16.msra.mxu0 %v874
    %1009 = vmatprep.subr.bf16.mxu0 0
    %1010 = vmatpush1.bf16.msra.mxu0 %v873
    %1011 = vmatprep.subr.bf16.mxu0 0
    %1012 = vmatpush1.bf16.msra.mxu0 %v872
    %1013 = vmatprep.subr.bf16.mxu0 0
    %1014 = vmatpush1.bf16.msra.mxu0 %v871
    %1015 = vmatprep.subr.bf16.mxu0 0
    %1016 = vmatpush2.bf16.msra.mxu0 %v886
    %1017 = vmatprep.subr.bf16.mxu0 0
    %1018 = vmatpush2.bf16.msra.mxu0 %v885
    %1019 = vmatprep.subr.bf16.mxu0 0
    %1020 = vmatpush2.bf16.msra.mxu0 %v884
    %1021 = vmatprep.subr.bf16.mxu0 0
    %1022 = vmatpush2.bf16.msra.mxu0 %v883
    %1023 = vmatprep.subr.bf16.mxu0 0
    %1024 = vmatpush2.bf16.msra.mxu0 %v882
    %1025 = vmatprep.subr.bf16.mxu0 0
    %1026 = vmatpush2.bf16.msra.mxu0 %v881
    %1027 = vmatprep.subr.bf16.mxu0 0
    %1028 = vmatpush2.bf16.msra.mxu0 %v880
    %1029 = vmatprep.subr.bf16.mxu0 0
    %1030 = vmatpush2.bf16.msra.mxu0 %v879
    %1031 = vmatprep.mubr.bf16.mxu0 %v473
    %1032 = vmatmul.mubr.bf16.gmra.mxu0 %v472
    %v1033 = vpop.f32.mrf.mxu0
    %v1034 = vadd.f32 %v613, %v1033
    %v1035 = vpop.f32.mrf.mxu0
    %v1036 = vpop.f32.mrf.mxu0
    %v1037 = vpop.f32.mrf.mxu0
    %1038 = vdwg.mxu0
    %1039 = vmatprep.subr.bf16.mxu0 0
    %1040 = vmatpush1.bf16.msra.mxu0 %v894
    %1041 = vmatprep.subr.bf16.mxu0 0
    %1042 = vmatpush1.bf16.msra.mxu0 %v893
    %1043 = vmatprep.subr.bf16.mxu0 0
    %1044 = vmatpush1.bf16.msra.mxu0 %v892
    %1045 = vmatprep.subr.bf16.mxu0 0
    %1046 = vmatpush1.bf16.msra.mxu0 %v891
    %1047 = vmatprep.subr.bf16.mxu0 0
    %1048 = vmatpush1.bf16.msra.mxu0 %v890
    %1049 = vmatprep.subr.bf16.mxu0 0
    %1050 = vmatpush1.bf16.msra.mxu0 %v889
    %1051 = vmatprep.subr.bf16.mxu0 0
    %1052 = vmatpush1.bf16.msra.mxu0 %v888
    %1053 = vmatprep.subr.bf16.mxu0 0
    %1054 = vmatpush1.bf16.msra.mxu0 %v887
    %1055 = vmatprep.subr.bf16.mxu0 0
    %1056 = vmatpush2.bf16.msra.mxu0 %v902
    %1057 = vmatprep.subr.bf16.mxu0 0
    %1058 = vmatpush2.bf16.msra.mxu0 %v901
    %1059 = vmatprep.subr.bf16.mxu0 0
    %1060 = vmatpush2.bf16.msra.mxu0 %v900
    %1061 = vmatprep.subr.bf16.mxu0 0
    %1062 = vmatpush2.bf16.msra.mxu0 %v899
    %1063 = vmatprep.subr.bf16.mxu0 0
    %1064 = vmatpush2.bf16.msra.mxu0 %v898
    %1065 = vmatprep.subr.bf16.mxu0 0
    %1066 = vmatpush2.bf16.msra.mxu0 %v897
    %1067 = vmatprep.subr.bf16.mxu0 0
    %1068 = vmatpush2.bf16.msra.mxu0 %v896
    %1069 = vmatprep.subr.bf16.mxu0 0
    %1070 = vmatpush2.bf16.msra.mxu0 %v895
    %1071 = vmatprep.mubr.bf16.mxu0 %v475
    %1072 = vmatmul.mubr.bf16.gmra.mxu0 %v474
    %v1073 = vpop.f32.mrf.mxu0
    %v1074 = vadd.f32 %v1034, %v1073
    %v1075 = vpop.f32.mrf.mxu0
    %v1076 = vpop.f32.mrf.mxu0
    %v1077 = vpop.f32.mrf.mxu0
    %1078 = vdwg.mxu0
    %1079 = vmatprep.subr.bf16.mxu0 0
    %1080 = vmatpush1.bf16.msra.mxu0 %v910
    %1081 = vmatprep.subr.bf16.mxu0 0
    %1082 = vmatpush1.bf16.msra.mxu0 %v909
    %1083 = vmatprep.subr.bf16.mxu0 0
    %1084 = vmatpush1.bf16.msra.mxu0 %v908
    %1085 = vmatprep.subr.bf16.mxu0 0
    %1086 = vmatpush1.bf16.msra.mxu0 %v907
    %1087 = vmatprep.subr.bf16.mxu0 0
    %1088 = vmatpush1.bf16.msra.mxu0 %v906
    %1089 = vmatprep.subr.bf16.mxu0 0
    %1090 = vmatpush1.bf16.msra.mxu0 %v905
    %1091 = vmatprep.subr.bf16.mxu0 0
    %1092 = vmatpush1.bf16.msra.mxu0 %v904
    %1093 = vmatprep.subr.bf16.mxu0 0
    %1094 = vmatpush1.bf16.msra.mxu0 %v903
    %1095 = vmatprep.subr.bf16.mxu0 0
    %1096 = vmatpush2.bf16.msra.mxu0 %v918
    %1097 = vmatprep.subr.bf16.mxu0 0
    %1098 = vmatpush2.bf16.msra.mxu0 %v917
    %1099 = vmatprep.subr.bf16.mxu0 0
    %1100 = vmatpush2.bf16.msra.mxu0 %v916
    %1101 = vmatprep.subr.bf16.mxu0 0
    %1102 = vmatpush2.bf16.msra.mxu0 %v915
    %1103 = vmatprep.subr.bf16.mxu0 0
    %1104 = vmatpush2.bf16.msra.mxu0 %v914
    %1105 = vmatprep.subr.bf16.mxu0 0
    %1106 = vmatpush2.bf16.msra.mxu0 %v913
    %1107 = vmatprep.subr.bf16.mxu0 0
    %1108 = vmatpush2.bf16.msra.mxu0 %v912
    %1109 = vmatprep.subr.bf16.mxu0 0
    %1110 = vmatpush2.bf16.msra.mxu0 %v911
    %1111 = vmatprep.mubr.bf16.mxu0 %v477
    %1112 = vmatmul.mubr.bf16.gmra.mxu0 %v476
    %v1113 = vpop.f32.mrf.mxu0
    %v1114 = vadd.f32 %v1074, %v1113
    %v1115 = vpop.f32.mrf.mxu0
    %v1116 = vpop.f32.mrf.mxu0
    %v1117 = vpop.f32.mrf.mxu0
    %1118 = vdwg.mxu0
    %1119 = vmatprep.subr.bf16.mxu0 0
    %1120 = vmatpush1.bf16.msra.mxu0 %v926
    %1121 = vmatprep.subr.bf16.mxu0 0
    %1122 = vmatpush1.bf16.msra.mxu0 %v925
    %1123 = vmatprep.subr.bf16.mxu0 0
    %1124 = vmatpush1.bf16.msra.mxu0 %v924
    %1125 = vmatprep.subr.bf16.mxu0 0
    %1126 = vmatpush1.bf16.msra.mxu0 %v923
    %1127 = vmatprep.subr.bf16.mxu0 0
    %1128 = vmatpush1.bf16.msra.mxu0 %v922
    %1129 = vmatprep.subr.bf16.mxu0 0
    %1130 = vmatpush1.bf16.msra.mxu0 %v921
    %1131 = vmatprep.subr.bf16.mxu0 0
    %1132 = vmatpush1.bf16.msra.mxu0 %v920
    %1133 = vmatprep.subr.bf16.mxu0 0
    %1134 = vmatpush1.bf16.msra.mxu0 %v919
    %1135 = vmatprep.subr.bf16.mxu0 0
    %1136 = vmatpush2.bf16.msra.mxu0 %v934
    %1137 = vmatprep.subr.bf16.mxu0 0
    %1138 = vmatpush2.bf16.msra.mxu0 %v933
    %1139 = vmatprep.subr.bf16.mxu0 0
    %1140 = vmatpush2.bf16.msra.mxu0 %v932
    %1141 = vmatprep.subr.bf16.mxu0 0
    %1142 = vmatpush2.bf16.msra.mxu0 %v931
    %1143 = vmatprep.subr.bf16.mxu0 0
    %1144 = vmatpush2.bf16.msra.mxu0 %v930
    %1145 = vmatprep.subr.bf16.mxu0 0
    %1146 = vmatpush2.bf16.msra.mxu0 %v929
    %1147 = vmatprep.subr.bf16.mxu0 0
    %1148 = vmatpush2.bf16.msra.mxu0 %v928
    %1149 = vmatprep.subr.bf16.mxu0 0
    %1150 = vmatpush2.bf16.msra.mxu0 %v927
    %1151 = vmatprep.mubr.bf16.mxu0 %v479
    %1152 = vmatmul.mubr.bf16.gmra.mxu0 %v478
    %v1153 = vpop.f32.mrf.mxu0
    %v1154 = vadd.f32 %v1114, %v1153
    %v1155 = vpop.f32.mrf.mxu0
    %v1156 = vpop.f32.mrf.mxu0
    %v1157 = vpop.f32.mrf.mxu0
    %1158 = vdwg.mxu0
    %v1159 = vmax.f32 %v1154, 0.0
    %v1160 = vpack.c.bf16 %v1159, %v1159
    %v1161 = vld [vmem:[#allocation7] sm:$0xf]
    %v1162 = vld [vmem:[#allocation7 + $0x4] sm:$0xf]
    %v1163 = vld [vmem:[#allocation7 + $0x8] sm:$0xf]
    %v1164 = vld [vmem:[#allocation7 + $0xc] sm:$0xf]
    %v1165 = vld [vmem:[#allocation7 + $0x10] sm:$0xf]
    %v1166 = vld [vmem:[#allocation7 + $0x14] sm:$0xf]
    %v1167 = vld [vmem:[#allocation7 + $0x18] sm:$0xf]
    %v1168 = vld [vmem:[#allocation7 + $0x1c] sm:$0xf]
    %v1169 = vld [vmem:[#allocation7 + $0x20] sm:$0xf]
    %v1170 = vld [vmem:[#allocation7 + $0x24] sm:$0xf]
    %v1171 = vld [vmem:[#allocation7 + $0x28] sm:$0xf]
    %v1172 = vld [vmem:[#allocation7 + $0x2c] sm:$0xf]
    %v1173 = vld [vmem:[#allocation7 + $0x30] sm:$0xf]
    %v1174 = vld [vmem:[#allocation7 + $0x34] sm:$0xf]
    %v1175 = vld [vmem:[#allocation7 + $0x38] sm:$0xf]
    %v1176 = vld [vmem:[#allocation7 + $0x3c] sm:$0xf]
    %v1177 = vld [vmem:[#allocation9] sm:$0x1]
    %v1179 = vlaneseq
    %v1180 = vshrl.u32 %v1179, 7
    %v1181 = vsub.s32 0, %v1180
    %v1182 = vrot.slane %v1177, %v1181
    %v1200 = vunpack.c.l.b16 %v1161
    %v1201 = vunpack.c.l.b16 %v1162
    %v1202 = vunpack.c.l.b16 %v1163
    %v1203 = vunpack.c.l.b16 %v1164
    %v1204 = vunpack.c.l.b16 %v1165
    %v1205 = vunpack.c.l.b16 %v1166
    %v1206 = vunpack.c.l.b16 %v1167
    %v1207 = vunpack.c.l.b16 %v1168
    %v1208 = vunpack.c.l.b16 %v1169
    %v1209 = vunpack.c.l.b16 %v1170
    %v1210 = vunpack.c.l.b16 %v1171
    %v1211 = vunpack.c.l.b16 %v1172
    %v1212 = vunpack.c.l.b16 %v1173
    %v1213 = vunpack.c.l.b16 %v1174
    %v1214 = vunpack.c.l.b16 %v1175
    %v1215 = vunpack.c.l.b16 %v1176
    %v1216 = vpack.c.b16 %v1201, %v1200
    %v1217 = vpack.c.b16 %v1203, %v1202
    %v1218 = vpack.c.b16 %v1205, %v1204
    %v1219 = vpack.c.b16 %v1207, %v1206
    %v1220 = vpack.c.b16 %v1209, %v1208
    %v1221 = vpack.c.b16 %v1211, %v1210
    %v1222 = vpack.c.b16 %v1213, %v1212
    %v1223 = vpack.c.b16 %v1215, %v1214
    %1232 = vmatprep.subr.bf16.mxu0 0
    %1233 = vmatpush1.bf16.msra.mxu0 %v1223
    %1234 = vmatprep.subr.bf16.mxu0 0
    %1235 = vmatpush1.bf16.msra.mxu0 %v1222
    %1236 = vmatprep.subr.bf16.mxu0 0
    %1237 = vmatpush1.bf16.msra.mxu0 %v1221
    %1238 = vmatprep.subr.bf16.mxu0 0
    %1239 = vmatpush1.bf16.msra.mxu0 %v1220
    %1240 = vmatprep.subr.bf16.mxu0 0
    %1241 = vmatpush1.bf16.msra.mxu0 %v1219
    %1242 = vmatprep.subr.bf16.mxu0 0
    %1243 = vmatpush1.bf16.msra.mxu0 %v1218
    %1244 = vmatprep.subr.bf16.mxu0 0
    %1245 = vmatpush1.bf16.msra.mxu0 %v1217
    %1246 = vmatprep.subr.bf16.mxu0 0
    %1247 = vmatpush1.bf16.msra.mxu0 %v1216
    %1248 = vmatprep.subr.bf16.mxu0 0
    %1249 = vmatpush2.bf16.msra.mxu0 0
    %1250 = vmatprep.subr.bf16.mxu0 0
    %1251 = vmatpush2.bf16.msra.mxu0 0
    %1252 = vmatprep.subr.bf16.mxu0 0
    %1253 = vmatpush2.bf16.msra.mxu0 0
    %1254 = vmatprep.subr.bf16.mxu0 0
    %1255 = vmatpush2.bf16.msra.mxu0 0
    %1256 = vmatprep.subr.bf16.mxu0 0
    %1257 = vmatpush2.bf16.msra.mxu0 0
    %1258 = vmatprep.subr.bf16.mxu0 0
    %1259 = vmatpush2.bf16.msra.mxu0 0
    %1260 = vmatprep.subr.bf16.mxu0 0
    %1261 = vmatpush2.bf16.msra.mxu0 0
    %1262 = vmatprep.subr.bf16.mxu0 0
    %1263 = vmatpush2.bf16.msra.mxu0 0
    %1264 = vmatprep.mubr.bf16.mxu0 0
    %1265 = vmatmul.mubr.bf16.gmra.mxu0 %v1160
    %v1266 = vpop.f32.mrf.mxu0
    %v1267 = vadd.f32 %v1182, %v1266
    %v1268 = vpop.f32.mrf.mxu0
    %v1269 = vpop.f32.mrf.mxu0
    %v1270 = vpop.f32.mrf.mxu0
    %1271 = vdwg.mxu0
    %1272 = vst [vmem:[%s7] sm:$0xff] %v1267
    // Predicated region
    $region50: #{mlp_with_uncertainty_forward.1} parent=1 // pred_check
      _
    $region51: #{mlp_with_uncertainty_forward.1} parent=1 // pred_check_branch
      %1274 = sbr.rel (0) target = $region53
    $region52: #{mlp_with_uncertainty_forward.1} parent=1 // pred_region
      _
    $region53: #{mlp_with_uncertainty_forward.1} parent=1 // pred_fallthru
      _
    // Predicated region
    $region54: #{mlp_with_uncertainty_forward.1} parent=1 // pred_check
      _
    $region55: #{mlp_with_uncertainty_forward.1} parent=1 // pred_check_branch
      %1276 = sbr.rel (0) target = $region57
    $region56: #{mlp_with_uncertainty_forward.1} parent=1 // pred_region
      _
    $region57: #{mlp_with_uncertainty_forward.1} parent=1 // pred_fallthru
      _
    %1277 = vsyncpa [#allocation3], 1
    %1278 = vsyncpa [#allocation5], 1
    %1279 = vsyncpa [#allocation8], 1

</llo_original>
